<compile_context>
chip_gen: v7x
topology: tpu7x:2x2x1
jax: 0.10.0
libtpu: 0.0.40
codegen_flags: <defaults>
</compile_context>

<pallas_src>
import numpy as np
import jax
import jax.numpy as jnp
from jax.experimental import pallas as pl
from jax.experimental.pallas import tpu as pltpu


def scalenorm_kernel(sp_ref, x_ref, o_ref):
    # sp_ref: (T_R, 1) softplus(scale) rows matching this row-tile.
    # x_ref / o_ref: (T_R, T_HW) lane-dense block.
    o_ref[...] = (x_ref[...] * sp_ref[...]).astype(o_ref.dtype)


def _pick_tiles(nc, hw, itemsize, target_bytes=3 << 20):
    """Tile sizes for the (NC, HW) view.

    Lanes (last dim): largest 128-multiple <= HW, capped by the byte budget; if
    HW < 128 take the full dim (block == full dim is always layout-legal).
    Sublanes (rows): as many dtype-aligned rows as fit target_bytes per block.
    Neither tile must divide its axis -- the grid uses cdiv and Pallas masks the
    ragged boundary blocks.
    """
    sub = {1: 32, 2: 16}.get(itemsize, 8)        # min sublane multiple per dtype
    if hw <= 128:
        t_hw = hw
    else:
        cap = max(128, (target_bytes // (sub * itemsize)) // 128 * 128)
        t_hw = min((hw // 128) * 128, cap)
    rows = max(sub, (target_bytes // max(1, t_hw * itemsize)) // sub * sub)
    t_r = nc if nc <= rows else rows
    return t_r, t_hw


def scale_norm(x, scale, *, donate_x=False):
    """x: (N, C, *spatial); scale: (C,) raw (pre-softplus) parameter."""
    N, C = x.shape[0], x.shape[1]
    HW = int(np.prod(x.shape[2:])) if x.ndim > 2 else 1
    NC = N * C
    x2 = x.reshape(NC, HW)

    # Hoisted parameter transform (C elements), tiled per row of the (NC, HW) view.
    sp = jax.nn.softplus(scale.astype(jnp.float32))
    if jnp.issubdtype(x.dtype, jnp.floating):
        sp = sp.astype(x.dtype)          # native-dtype multiply (no per-vreg upcast)
    sp_rows = jnp.broadcast_to(sp[None, :], (N, C)).reshape(NC, 1)

    itemsize = x.dtype.itemsize
    t_r, t_hw = _pick_tiles(NC, HW, itemsize)
    grid = (pl.cdiv(NC, t_r), pl.cdiv(HW, t_hw))

    cost = pl.CostEstimate(
        flops=NC * HW,                                              # one mul / element
        bytes_accessed=2 * NC * HW * itemsize + NC * sp_rows.dtype.itemsize,
        transcendentals=0,                                          # softplus in wrapper
    )

    out2 = pl.pallas_call(
        scalenorm_kernel,
        out_shape=jax.ShapeDtypeStruct((NC, HW), x.dtype),
        grid_spec=pltpu.PrefetchScalarGridSpec(
            num_scalar_prefetch=0,
            grid=grid,
            in_specs=[
                pl.BlockSpec((t_r, 1), lambda r, t: (r, 0)),        # per-row scale
                pl.BlockSpec((t_r, t_hw), lambda r, t: (r, t)),     # x block
            ],
            out_specs=pl.BlockSpec((t_r, t_hw), lambda r, t: (r, t)),
        ),
        compiler_params=pltpu.CompilerParams(
            dimension_semantics=("parallel", "parallel")),
        cost_estimate=cost,
        # Reuse x's HBM buffer for the output when the caller donates x.
        input_output_aliases=({1: 0} if donate_x else {}),
    )(sp_rows, x2)

    return out2.reshape(x.shape)


if __name__ == "__main__":
    # Module parameters: num_features = C, init_scale = 1
    N, C, H, W = 2, 4, 16, 16
    init_scale = 1.0
    # Same parameter init formula as the PyTorch __init__:
    scale_param = jnp.full((C,), np.log(np.exp(init_scale) - 1.0), dtype=jnp.float32)

    key = jax.random.PRNGKey(0)
    x = jax.random.normal(key, (N, C, H, W), dtype=jnp.float32)

    out = jax.block_until_ready(scale_norm(x, scale_param))

    # Pure-JAX reference (softplus broadcast over channel dim, NCHW)
    ref = x * jax.nn.softplus(scale_param).reshape(1, C, 1, 1)
    np.testing.assert_allclose(np.asarray(out), np.asarray(ref), rtol=1e-6, atol=1e-6)

    print("KERNEL_OK")
</pallas_src>

<mosaic_0001>
module attributes {stable_mosaic.version = 11 : i64} {
  func.func @scalenorm_kernel(%arg0: i32, %arg1: i32, %arg2: memref<8x1xf32, #tpu.memory_space<vmem>>, %arg3: memref<8x256xf32, #tpu.memory_space<vmem>>, %arg4: memref<8x256xf32, #tpu.memory_space<vmem>>) attributes {dimension_semantics = [#tpu.dimension_semantics<parallel>, #tpu.dimension_semantics<parallel>], iteration_bounds = array<i64: 1, 1>, scalar_prefetch = 0 : i64, scratch_operands = 0 : i64, tpu.core_type = #tpu.core_type<tc>, window_params = [{transform_indices = @transform_0, window_bounds = array<i64: 8, 1>}, {transform_indices = @transform_1, window_bounds = array<i64: 8, 256>}, {transform_indices = @transform_2, window_bounds = array<i64: 8, 256>}]} {
    %c0 = arith.constant 0 : index
    %c0_0 = arith.constant 0 : index
    %0 = vector.load %arg3[%c0, %c0_0] : memref<8x256xf32, #tpu.memory_space<vmem>>, vector<8x256xf32>
    %c0_1 = arith.constant 0 : index
    %c0_2 = arith.constant 0 : index
    %1 = vector.load %arg2[%c0_1, %c0_2] : memref<8x1xf32, #tpu.memory_space<vmem>>, vector<8x1xf32>
    %2 = vector.broadcast %1 : vector<8x1xf32> to vector<8x256xf32>
    %3 = arith.mulf %0, %2 : vector<8x256xf32>
    %c0_3 = arith.constant 0 : index
    %c0_4 = arith.constant 0 : index
    %4 = vector.load %arg4[%c0_3, %c0_4] : memref<8x256xf32, #tpu.memory_space<vmem>>, vector<8x256xf32>
    tpu.vector_store %arg4[%c0_3, %c0_4], %3 {strides = array<i32>} : memref<8x256xf32, #tpu.memory_space<vmem>>, vector<8x256xf32>,
    return
  }
  func.func @transform_0(%arg0: i32, %arg1: i32) -> (i32, i32) {
    %c0_i32 = arith.constant 0 : i32
    %c0_i32_0 = arith.constant 0 : i32
    return %arg0, %c0_i32 : i32, i32
  }
  func.func @transform_1(%arg0: i32, %arg1: i32) -> (i32, i32) {
    %c0_i32 = arith.constant 0 : i32
    return %arg0, %arg1 : i32, i32
  }
  func.func @transform_2(%arg0: i32, %arg1: i32) -> (i32, i32) {
    %c0_i32 = arith.constant 0 : i32
    return %arg0, %arg1 : i32, i32
  }
}

</mosaic_0001>

<llo_original>
// kernel: tpu_custom_call.1
$region0: #{tpu_custom_call.1}
  #allocation0 [shape = 'u32[]', space=smem, size = 0x4, offset = 0x4, fixed_abs, tag = 'smem constant byte address 0x4 - core index']
  #allocation1 [shape = 'u32[144,128]{1,0:T(1,128)}', space=vmem, size = 0x12000, scoped, tag = 'internal scratch']
  %s0 = inlined_call_operand.vmem [shape: f32[8,1], index: 0, kind: input, shape index: {}]
  %s1 = inlined_call_operand.hbm [shape: f32[8,256], index: 1, kind: input, shape index: {}]
  %s2 = inlined_call_operand.hbm [shape: f32[8,256], index: 2, kind: output, shape index: {}]
  %s3 = sld [smem:[#allocation0]]
  $region22: #{tpu_custom_call.1} parent=0
    _
  %s5 = ssub.s32 1, %s3
  %s6 = scalar_select 0, %s5, %s3
  $region1: #{tpu_custom_call.1} parent=0
    #allocation2 [shape = 'u8[8192]{0}', space=vmem, size = 0x2000, scoped, tag = 'input window, operand 1, single buffered']
    #allocation3 [shape = 's32[1]{0}', space=sflag, size = 0x4, scoped, tag = 'scoped memory for tpu_custom_call.1']
    #allocation4 [shape = 's32[1]{0}', space=sflag, size = 0x4, scoped, tag = 'scoped memory for tpu_custom_call.1']
    #allocation5 [shape = 'u8[8192]{0}', space=vmem, size = 0x2000, scoped, tag = 'output window, operand 0, single buffered']
    %7 = vsyncpa [#allocation3], 0
    %8 = vsyncpa [#allocation4], 0
    // Predicated region
    $region2: #{tpu_custom_call.1} parent=1 // pred_check
      _
    $region3: #{tpu_custom_call.1} parent=1 // pred_check_branch
      %10 = sbr.rel (0) target = $region5
    $region4: #{tpu_custom_call.1} parent=1 // pred_region
      _
    $region5: #{tpu_custom_call.1} parent=1 // pred_fallthru
      _
    // Predicated region
    $region6: #{tpu_custom_call.1} parent=1 // pred_check
      _
    $region7: #{tpu_custom_call.1} parent=1 // pred_check_branch
      %12 = sbr.rel (0) target = $region9
    $region8: #{tpu_custom_call.1} parent=1 // pred_region
      %s14 = ssub.s32 256, 256
      %15 = vsyncadd [#allocation3], %s14
      %s17 = sshll.u32 [#allocation2], 4
      %s18 = int_to_ptr.vmem [resolvable:$true] %s17
      %20 = dma.hbm_to_vmem [thread:$0]  %s1, 256, %s18, [#allocation3]
    $region9: #{tpu_custom_call.1} parent=1 // pred_fallthru
      _
    // Predicated region
    $region10: #{tpu_custom_call.1} parent=1 // pred_check
      _
    $region11: #{tpu_custom_call.1} parent=1 // pred_check_branch
      %22 = sbr.rel (0) target = $region13
    $region12: #{tpu_custom_call.1} parent=1 // pred_region
      %23 = dma.done [#allocation3], 256
    $region13: #{tpu_custom_call.1} parent=1 // pred_fallthru
      _
    %v24 = vld [vmem:[#allocation2] sm:$0xff]
    %v25 = vld [vmem:[#allocation2 + $0x8] sm:$0xff]
    %v26 = vld [vmem:[%s0] sm:$0xff]
    %28 = vset.pattern.permute.xlu0 0
    %29 = vperm.xlu0 %28, %v26
    %v30 = vpop.permute.xlu0 %29
    %v32 = vmul.f32 %v24, %v30
    %v33 = vmul.f32 %v25, %v30
    %34 = vst [vmem:[#allocation5] sm:$0xff] %v32
    %35 = vst [vmem:[#allocation5 + $0x8] sm:$0xff] %v33
    // Predicated region
    $region14: #{tpu_custom_call.1} parent=1 // pred_check
      _
    $region15: #{tpu_custom_call.1} parent=1 // pred_check_branch
      %37 = sbr.rel (0) target = $region17
    $region16: #{tpu_custom_call.1} parent=1 // pred_region
      %s39 = ssub.s32 256, 256
      %40 = vsyncadd [#allocation4], %s39
      %s42 = sshll.u32 [#allocation5], 4
      %s43 = int_to_ptr.vmem [resolvable:$true] %s42
      %45 = dma.vmem_to_hbm [thread:$0]  %s43, 256, %s2, [#allocation4]
    $region17: #{tpu_custom_call.1} parent=1 // pred_fallthru
      _
    // Predicated region
    $region18: #{tpu_custom_call.1} parent=1 // pred_check
      _
    $region19: #{tpu_custom_call.1} parent=1 // pred_check_branch
      %47 = sbr.rel (0) target = $region21
    $region20: #{tpu_custom_call.1} parent=1 // pred_region
      %48 = dma.done [#allocation4], 256
    $region21: #{tpu_custom_call.1} parent=1 // pred_fallthru
      _
    %49 = vsyncpa [#allocation3], 1
    %50 = vsyncpa [#allocation4], 1

</llo_original>
